<compile_context>
chip_gen: v7x
topology: tpu7x:2x2x1
jax: 0.10.0
libtpu: 0.0.40
codegen_flags: <defaults>
</compile_context>

<pallas_src>
import functools
import math

import numpy as np
import jax
import jax.numpy as jnp
from jax.experimental import pallas as pl
from jax.experimental.pallas import tpu as pltpu


def routing_kernel(x_ref, wdw_ref, gamma_ref, beta_ref, wcat_ref, bcat_ref,
                   mask_ref, out_ref, *, B, C, H, W, K, proportion):
    HW = H * W
    x = x_ref[...].astype(jnp.float32)                       # (B, C, HW)

    # --- depthwise 3x3 conv: 9 lane-rolls of the flattened spatial axis ---
    acc = jnp.zeros((B, C, HW), jnp.float32)
    for kh in range(3):
        for kw in range(3):
            k = kh * 3 + kw
            dh, dw = kh - 1, kw - 1                          # tap offsets in {-1,0,1}
            shift = (-(dh * W + dw)) % HW                    # rolled[i] = x[i - shift]
            xs = pltpu.roll(x, shift, axis=2) if shift else x
            if dh != 0 or dw != 0:
                xs = xs * mask_ref[k]                        # zero the padded border
            w_k = wdw_ref[:, k:k + 1][None]                  # (1, C, 1) per-channel weight
            acc = acc + xs * w_k

    # --- LayerNorm over C (eps=1e-5, elementwise affine) ---
    mu = jnp.mean(acc, axis=1, keepdims=True)
    var = jnp.mean(jnp.square(acc - mu), axis=1, keepdims=True)
    y = (acc - mu) * jax.lax.rsqrt(var + 1e-5)
    y = y * gamma_ref[...][None] + beta_ref[...][None]

    # --- ReLU + AdaptiveAvgPool2d((1,1)) ---
    y = jnp.maximum(y, 0.0)
    pooled = jnp.sum(y, axis=2) * (1.0 / HW)                 # (B, C)

    # --- fused FC heads: one (B, C) x (C, 2K) product; dropout = identity in eval ---
    if C <= 16:
        # tiny C: do it as C VPU fused multiply-adds, no MXU push
        out = jnp.zeros((B, 2 * K), jnp.float32) + bcat_ref[...]
        for c in range(C):
            out = out + pooled[:, c:c + 1] * wcat_ref[c:c + 1, :]
    else:
        out = jnp.dot(pooled, wcat_ref[...],
                      preferred_element_type=jnp.float32) + bcat_ref[...]

    lane = jax.lax.broadcasted_iota(jnp.int32, (B, 2 * K), 1)
    sig = jax.nn.sigmoid(out)                                # alpha head
    ang = (out / (1.0 + jnp.abs(out))) * proportion          # theta head: softsign * p
    out_ref[...] = jnp.where(lane < K, sig, ang)             # single (B, 2K) store


def _border_masks(H, W):
    """(9, 1, 1, H*W) f32 masks: mask[k]==1 where tap (kh,kw) reads inside the
    un-padded image — implements conv padding=1 without materializing jnp.pad."""
    m = np.zeros((9, 1, 1, H * W), np.float32)
    for kh in range(3):
        for kw in range(3):
            dh, dw = kh - 1, kw - 1
            plane = np.zeros((H, W), np.float32)
            plane[max(0, -dh):min(H, H - dh), max(0, -dw):min(W, W - dw)] = 1.0
            m[kh * 3 + kw, 0, 0, :] = plane.reshape(-1)
    return m


@functools.partial(jax.jit, static_argnames=("proportion",))
def routing_function(x_nchw, w_dwc, gamma, beta, w_alpha, b_alpha, w_theta, *,
                     proportion):
    """x_nchw: (B, C, H, W) (PyTorch convention). Returns (alphas, angles), each (B, K)."""
    B, C, H, W = x_nchw.shape
    K = w_alpha.shape[0]

    # Free row-major reshapes only — no transpose, no spatial padding in the wrapper.
    x = x_nchw.reshape(B, C, H * W)                          # (B, C, HW)
    wdw = w_dwc.reshape(C, 9)                                # (C, 9), tap index kh*3+kw
    gamma2 = gamma.reshape(C, 1)
    beta2 = beta.reshape(C, 1)
    wcat = jnp.concatenate([w_alpha.T, w_theta.T], axis=1)   # (C, 2K): [alpha | theta]
    bcat = jnp.concatenate(
        [b_alpha, jnp.zeros((K,), b_alpha.dtype)]).reshape(1, 2 * K)
    masks = jnp.asarray(_border_masks(H, W))                 # compile-time constant

    kernel = functools.partial(routing_kernel, B=B, C=C, H=H, W=W, K=K,
                               proportion=float(proportion))
    out = pl.pallas_call(
        kernel,
        out_shape=jax.ShapeDtypeStruct((B, 2 * K), jnp.float32),
    )(x, wdw, gamma2, beta2, wcat, bcat, masks)
    return out[:, :K], out[:, K:]


def reference_jax(x_nchw, w_dwc, gamma, beta, w_alpha, b_alpha, w_theta, proportion):
    """Pure-JAX reference mirroring the PyTorch module (eval mode)."""
    B, C, H, W = x_nchw.shape
    y = jax.lax.conv_general_dilated(
        x_nchw, w_dwc, window_strides=(1, 1), padding=((1, 1), (1, 1)),
        dimension_numbers=("NCHW", "OIHW", "NCHW"), feature_group_count=C)
    y = jnp.transpose(y, (0, 2, 3, 1))
    mu = jnp.mean(y, axis=-1, keepdims=True)
    var = jnp.mean((y - mu) ** 2, axis=-1, keepdims=True)
    y = (y - mu) / jnp.sqrt(var + 1e-5) * gamma + beta
    y = jnp.maximum(y, 0.0)
    pooled = jnp.mean(y, axis=(1, 2))                        # (B, C)
    alphas = jax.nn.sigmoid(pooled @ w_alpha.T + b_alpha)
    t = pooled @ w_theta.T
    angles = (t / (1.0 + jnp.abs(t))) * proportion
    return alphas, angles


if __name__ == "__main__":
    B, C, H, W = 2, 4, 16, 16
    kernel_number = 8
    proportion = 40.0 / 180.0 * math.pi

    key = jax.random.PRNGKey(0)
    k_x, k_dwc, k_wa, k_ba, k_wt = jax.random.split(key, 5)

    x = jax.random.normal(k_x, (B, C, H, W), dtype=jnp.float32)

    # Deterministic parameter init (matching the module's trunc_normal_(std=0.02) intent).
    w_dwc = 0.02 * jax.random.truncated_normal(k_dwc, -2.0, 2.0, (C, 1, 3, 3), jnp.float32)
    gamma = jnp.ones((C,), jnp.float32)
    beta = jnp.zeros((C,), jnp.float32)
    w_alpha = 0.02 * jax.random.truncated_normal(k_wa, -2.0, 2.0, (kernel_number, C), jnp.float32)
    b_alpha = 0.01 * jax.random.normal(k_ba, (kernel_number,), jnp.float32)
    w_theta = 0.02 * jax.random.truncated_normal(k_wt, -2.0, 2.0, (kernel_number, C), jnp.float32)

    alphas, angles = routing_function(x, w_dwc, gamma, beta, w_alpha, b_alpha,
                                      w_theta, proportion=proportion)
    jax.block_until_ready((alphas, angles))

    ref_a, ref_t = reference_jax(x, w_dwc, gamma, beta, w_alpha, b_alpha,
                                 w_theta, proportion)
    assert alphas.shape == (B, kernel_number) and angles.shape == (B, kernel_number)
    assert jnp.allclose(alphas, ref_a, rtol=1e-4, atol=1e-5)
    assert jnp.allclose(angles, ref_t, rtol=1e-4, atol=1e-5)

    print("KERNEL_OK")
</pallas_src>

<mosaic_0001>
module attributes {stable_mosaic.version = 11 : i64} {
  func.func @routing_kernel(%arg0: memref<2x4x256xf32, #tpu.memory_space<vmem>>, %arg1: memref<4x9xf32, #tpu.memory_space<vmem>>, %arg2: memref<4x1xf32, #tpu.memory_space<vmem>>, %arg3: memref<4x1xf32, #tpu.memory_space<vmem>>, %arg4: memref<4x16xf32, #tpu.memory_space<vmem>>, %arg5: memref<1x16xf32, #tpu.memory_space<vmem>>, %arg6: memref<9x1x1x256xf32, #tpu.memory_space<vmem>>, %arg7: memref<2x16xf32, #tpu.memory_space<vmem>>) attributes {dimension_semantics = [], scalar_prefetch = 0 : i64, scratch_operands = 0 : i64, tpu.core_type = #tpu.core_type<tc>} {
    %c0 = arith.constant 0 : index
    %c0_0 = arith.constant 0 : index
    %c0_1 = arith.constant 0 : index
    %0 = vector.load %arg0[%c0, %c0_0, %c0_1] : memref<2x4x256xf32, #tpu.memory_space<vmem>>, vector<2x4x256xf32>
    %cst = arith.constant 0.000000e+00 : f32
    %1 = vector.broadcast %cst : f32 to vector<2x4x256xf32>
    %c17_i32 = arith.constant 17 : i32
    %2 = tpu.dynamic_rotate %0 by %c17_i32 dim 2 : vector<2x4x256xf32>, i32 -> vector<2x4x256xf32>
    %c0_2 = arith.constant 0 : index
    %c0_3 = arith.constant 0 : index
    %c0_4 = arith.constant 0 : index
    %c0_5 = arith.constant 0 : index
    %3 = vector.load %arg6[%c0_2, %c0_3, %c0_4, %c0_5] : memref<9x1x1x256xf32, #tpu.memory_space<vmem>>, vector<1x1x1x256xf32>
    %4 = vector.shape_cast %3 : vector<1x1x1x256xf32> to vector<1x1x256xf32>
    %5 = vector.broadcast %4 : vector<1x1x256xf32> to vector<2x4x256xf32>
    %6 = arith.mulf %2, %5 : vector<2x4x256xf32>
    %c0_6 = arith.constant 0 : index
    %c0_7 = arith.constant 0 : index
    %7 = vector.load %arg1[%c0_6, %c0_7] : memref<4x9xf32, #tpu.memory_space<vmem>>, vector<4x1xf32>
    %8 = vector.shape_cast %7 : vector<4x1xf32> to vector<1x4x1xf32>
    %9 = vector.broadcast %8 : vector<1x4x1xf32> to vector<2x4x256xf32>
    %10 = arith.mulf %6, %9 : vector<2x4x256xf32>
    %11 = arith.addf %1, %10 : vector<2x4x256xf32>
    %c16_i32 = arith.constant 16 : i32
    %12 = tpu.dynamic_rotate %0 by %c16_i32 dim 2 : vector<2x4x256xf32>, i32 -> vector<2x4x256xf32>
    %c1 = arith.constant 1 : index
    %c0_8 = arith.constant 0 : index
    %c0_9 = arith.constant 0 : index
    %c0_10 = arith.constant 0 : index
    %13 = vector.load %arg6[%c1, %c0_8, %c0_9, %c0_10] : memref<9x1x1x256xf32, #tpu.memory_space<vmem>>, vector<1x1x1x256xf32>
    %14 = vector.shape_cast %13 : vector<1x1x1x256xf32> to vector<1x1x256xf32>
    %15 = vector.broadcast %14 : vector<1x1x256xf32> to vector<2x4x256xf32>
    %16 = arith.mulf %12, %15 : vector<2x4x256xf32>
    %c0_11 = arith.constant 0 : index
    %c1_12 = arith.constant 1 : index
    %17 = vector.load %arg1[%c0_11, %c1_12] : memref<4x9xf32, #tpu.memory_space<vmem>>, vector<4x1xf32>
    %18 = vector.shape_cast %17 : vector<4x1xf32> to vector<1x4x1xf32>
    %19 = vector.broadcast %18 : vector<1x4x1xf32> to vector<2x4x256xf32>
    %20 = arith.mulf %16, %19 : vector<2x4x256xf32>
    %21 = arith.addf %11, %20 : vector<2x4x256xf32>
    %c15_i32 = arith.constant 15 : i32
    %22 = tpu.dynamic_rotate %0 by %c15_i32 dim 2 : vector<2x4x256xf32>, i32 -> vector<2x4x256xf32>
    %c2 = arith.constant 2 : index
    %c0_13 = arith.constant 0 : index
    %c0_14 = arith.constant 0 : index
    %c0_15 = arith.constant 0 : index
    %23 = vector.load %arg6[%c2, %c0_13, %c0_14, %c0_15] : memref<9x1x1x256xf32, #tpu.memory_space<vmem>>, vector<1x1x1x256xf32>
    %24 = vector.shape_cast %23 : vector<1x1x1x256xf32> to vector<1x1x256xf32>
    %25 = vector.broadcast %24 : vector<1x1x256xf32> to vector<2x4x256xf32>
    %26 = arith.mulf %22, %25 : vector<2x4x256xf32>
    %c0_16 = arith.constant 0 : index
    %c2_17 = arith.constant 2 : index
    %27 = vector.load %arg1[%c0_16, %c2_17] : memref<4x9xf32, #tpu.memory_space<vmem>>, vector<4x1xf32>
    %28 = vector.shape_cast %27 : vector<4x1xf32> to vector<1x4x1xf32>
    %29 = vector.broadcast %28 : vector<1x4x1xf32> to vector<2x4x256xf32>
    %30 = arith.mulf %26, %29 : vector<2x4x256xf32>
    %31 = arith.addf %21, %30 : vector<2x4x256xf32>
    %c1_i32 = arith.constant 1 : i32
    %32 = tpu.dynamic_rotate %0 by %c1_i32 dim 2 : vector<2x4x256xf32>, i32 -> vector<2x4x256xf32>
    %c3 = arith.constant 3 : index
    %c0_18 = arith.constant 0 : index
    %c0_19 = arith.constant 0 : index
    %c0_20 = arith.constant 0 : index
    %33 = vector.load %arg6[%c3, %c0_18, %c0_19, %c0_20] : memref<9x1x1x256xf32, #tpu.memory_space<vmem>>, vector<1x1x1x256xf32>
    %34 = vector.shape_cast %33 : vector<1x1x1x256xf32> to vector<1x1x256xf32>
    %35 = vector.broadcast %34 : vector<1x1x256xf32> to vector<2x4x256xf32>
    %36 = arith.mulf %32, %35 : vector<2x4x256xf32>
    %c0_21 = arith.constant 0 : index
    %c3_22 = arith.constant 3 : index
    %37 = vector.load %arg1[%c0_21, %c3_22] : memref<4x9xf32, #tpu.memory_space<vmem>>, vector<4x1xf32>
    %38 = vector.shape_cast %37 : vector<4x1xf32> to vector<1x4x1xf32>
    %39 = vector.broadcast %38 : vector<1x4x1xf32> to vector<2x4x256xf32>
    %40 = arith.mulf %36, %39 : vector<2x4x256xf32>
    %41 = arith.addf %31, %40 : vector<2x4x256xf32>
    %c0_23 = arith.constant 0 : index
    %c4 = arith.constant 4 : index
    %42 = vector.load %arg1[%c0_23, %c4] : memref<4x9xf32, #tpu.memory_space<vmem>>, vector<4x1xf32>
    %43 = vector.shape_cast %42 : vector<4x1xf32> to vector<1x4x1xf32>
    %44 = vector.broadcast %43 : vector<1x4x1xf32> to vector<2x4x256xf32>
    %45 = arith.mulf %0, %44 : vector<2x4x256xf32>
    %46 = arith.addf %41, %45 : vector<2x4x256xf32>
    %c255_i32 = arith.constant 255 : i32
    %47 = tpu.dynamic_rotate %0 by %c255_i32 dim 2 : vector<2x4x256xf32>, i32 -> vector<2x4x256xf32>
    %c5 = arith.constant 5 : index
    %c0_24 = arith.constant 0 : index
    %c0_25 = arith.constant 0 : index
    %c0_26 = arith.constant 0 : index
    %48 = vector.load %arg6[%c5, %c0_24, %c0_25, %c0_26] : memref<9x1x1x256xf32, #tpu.memory_space<vmem>>, vector<1x1x1x256xf32>
    %49 = vector.shape_cast %48 : vector<1x1x1x256xf32> to vector<1x1x256xf32>
    %50 = vector.broadcast %49 : vector<1x1x256xf32> to vector<2x4x256xf32>
    %51 = arith.mulf %47, %50 : vector<2x4x256xf32>
    %c0_27 = arith.constant 0 : index
    %c5_28 = arith.constant 5 : index
    %52 = vector.load %arg1[%c0_27, %c5_28] : memref<4x9xf32, #tpu.memory_space<vmem>>, vector<4x1xf32>
    %53 = vector.shape_cast %52 : vector<4x1xf32> to vector<1x4x1xf32>
    %54 = vector.broadcast %53 : vector<1x4x1xf32> to vector<2x4x256xf32>
    %55 = arith.mulf %51, %54 : vector<2x4x256xf32>
    %56 = arith.addf %46, %55 : vector<2x4x256xf32>
    %c241_i32 = arith.constant 241 : i32
    %57 = tpu.dynamic_rotate %0 by %c241_i32 dim 2 : vector<2x4x256xf32>, i32 -> vector<2x4x256xf32>
    %c6 = arith.constant 6 : index
    %c0_29 = arith.constant 0 : index
    %c0_30 = arith.constant 0 : index
    %c0_31 = arith.constant 0 : index
    %58 = vector.load %arg6[%c6, %c0_29, %c0_30, %c0_31] : memref<9x1x1x256xf32, #tpu.memory_space<vmem>>, vector<1x1x1x256xf32>
    %59 = vector.shape_cast %58 : vector<1x1x1x256xf32> to vector<1x1x256xf32>
    %60 = vector.broadcast %59 : vector<1x1x256xf32> to vector<2x4x256xf32>
    %61 = arith.mulf %57, %60 : vector<2x4x256xf32>
    %c0_32 = arith.constant 0 : index
    %c6_33 = arith.constant 6 : index
    %62 = vector.load %arg1[%c0_32, %c6_33] : memref<4x9xf32, #tpu.memory_space<vmem>>, vector<4x1xf32>
    %63 = vector.shape_cast %62 : vector<4x1xf32> to vector<1x4x1xf32>
    %64 = vector.broadcast %63 : vector<1x4x1xf32> to vector<2x4x256xf32>
    %65 = arith.mulf %61, %64 : vector<2x4x256xf32>
    %66 = arith.addf %56, %65 : vector<2x4x256xf32>
    %c240_i32 = arith.constant 240 : i32
    %67 = tpu.dynamic_rotate %0 by %c240_i32 dim 2 : vector<2x4x256xf32>, i32 -> vector<2x4x256xf32>
    %c7 = arith.constant 7 : index
    %c0_34 = arith.constant 0 : index
    %c0_35 = arith.constant 0 : index
    %c0_36 = arith.constant 0 : index
    %68 = vector.load %arg6[%c7, %c0_34, %c0_35, %c0_36] : memref<9x1x1x256xf32, #tpu.memory_space<vmem>>, vector<1x1x1x256xf32>
    %69 = vector.shape_cast %68 : vector<1x1x1x256xf32> to vector<1x1x256xf32>
    %70 = vector.broadcast %69 : vector<1x1x256xf32> to vector<2x4x256xf32>
    %71 = arith.mulf %67, %70 : vector<2x4x256xf32>
    %c0_37 = arith.constant 0 : index
    %c7_38 = arith.constant 7 : index
    %72 = vector.load %arg1[%c0_37, %c7_38] : memref<4x9xf32, #tpu.memory_space<vmem>>, vector<4x1xf32>
    %73 = vector.shape_cast %72 : vector<4x1xf32> to vector<1x4x1xf32>
    %74 = vector.broadcast %73 : vector<1x4x1xf32> to vector<2x4x256xf32>
    %75 = arith.mulf %71, %74 : vector<2x4x256xf32>
    %76 = arith.addf %66, %75 : vector<2x4x256xf32>
    %c239_i32 = arith.constant 239 : i32
    %77 = tpu.dynamic_rotate %0 by %c239_i32 dim 2 : vector<2x4x256xf32>, i32 -> vector<2x4x256xf32>
    %c8 = arith.constant 8 : index
    %c0_39 = arith.constant 0 : index
    %c0_40 = arith.constant 0 : index
    %c0_41 = arith.constant 0 : index
    %78 = vector.load %arg6[%c8, %c0_39, %c0_40, %c0_41] : memref<9x1x1x256xf32, #tpu.memory_space<vmem>>, vector<1x1x1x256xf32>
    %79 = vector.shape_cast %78 : vector<1x1x1x256xf32> to vector<1x1x256xf32>
    %80 = vector.broadcast %79 : vector<1x1x256xf32> to vector<2x4x256xf32>
    %81 = arith.mulf %77, %80 : vector<2x4x256xf32>
    %c0_42 = arith.constant 0 : index
    %c8_43 = arith.constant 8 : index
    %82 = vector.load %arg1[%c0_42, %c8_43] : memref<4x9xf32, #tpu.memory_space<vmem>>, vector<4x1xf32>
    %83 = vector.shape_cast %82 : vector<4x1xf32> to vector<1x4x1xf32>
    %84 = vector.broadcast %83 : vector<1x4x1xf32> to vector<2x4x256xf32>
    %85 = arith.mulf %81, %84 : vector<2x4x256xf32>
    %86 = arith.addf %76, %85 : vector<2x4x256xf32>
    %cst_44 = arith.constant dense<0.000000e+00> : vector<2x256xf32>
    %87 = vector.multi_reduction <add>, %86, %cst_44 [1] : vector<2x4x256xf32> to vector<2x256xf32>
    %88 = vector.shape_cast %87 : vector<2x256xf32> to vector<2x1x256xf32>
    %cst_45 = arith.constant 4.000000e+00 : f32
    %89 = vector.broadcast %cst_45 : f32 to vector<2x1x256xf32>
    %90 = arith.divf %88, %89 : vector<2x1x256xf32>
    %91 = vector.broadcast %90 : vector<2x1x256xf32> to vector<2x4x256xf32>
    %92 = arith.subf %86, %91 : vector<2x4x256xf32>
    %93 = arith.mulf %92, %92 : vector<2x4x256xf32>
    %cst_46 = arith.constant dense<0.000000e+00> : vector<2x256xf32>
    %94 = vector.multi_reduction <add>, %93, %cst_46 [1] : vector<2x4x256xf32> to vector<2x256xf32>
    %95 = vector.shape_cast %94 : vector<2x256xf32> to vector<2x1x256xf32>
    %cst_47 = arith.constant 4.000000e+00 : f32
    %96 = vector.broadcast %cst_47 : f32 to vector<2x1x256xf32>
    %97 = arith.divf %95, %96 : vector<2x1x256xf32>
    %98 = vector.broadcast %90 : vector<2x1x256xf32> to vector<2x4x256xf32>
    %99 = arith.subf %86, %98 : vector<2x4x256xf32>
    %cst_48 = arith.constant 9.99999974E-6 : f32
    %100 = vector.broadcast %cst_48 : f32 to vector<2x1x256xf32>
    %101 = arith.addf %97, %100 : vector<2x1x256xf32>
    %102 = math.rsqrt %101 : vector<2x1x256xf32>
    %103 = vector.broadcast %102 : vector<2x1x256xf32> to vector<2x4x256xf32>
    %104 = arith.mulf %99, %103 : vector<2x4x256xf32>
    %c0_49 = arith.constant 0 : index
    %c0_50 = arith.constant 0 : index
    %105 = vector.load %arg2[%c0_49, %c0_50] : memref<4x1xf32, #tpu.memory_space<vmem>>, vector<4x1xf32>
    %106 = vector.shape_cast %105 : vector<4x1xf32> to vector<1x4x1xf32>
    %107 = vector.broadcast %106 : vector<1x4x1xf32> to vector<2x4x256xf32>
    %108 = arith.mulf %104, %107 : vector<2x4x256xf32>
    %c0_51 = arith.constant 0 : index
    %c0_52 = arith.constant 0 : index
    %109 = vector.load %arg3[%c0_51, %c0_52] : memref<4x1xf32, #tpu.memory_space<vmem>>, vector<4x1xf32>
    %110 = vector.shape_cast %109 : vector<4x1xf32> to vector<1x4x1xf32>
    %111 = vector.broadcast %110 : vector<1x4x1xf32> to vector<2x4x256xf32>
    %112 = arith.addf %108, %111 : vector<2x4x256xf32>
    %cst_53 = arith.constant 0.000000e+00 : f32
    %113 = vector.broadcast %cst_53 : f32 to vector<2x4x256xf32>
    %114 = arith.maximumf %112, %113 : vector<2x4x256xf32>
    %cst_54 = arith.constant dense<0.000000e+00> : vector<2x4xf32>
    %115 = vector.multi_reduction <add>, %114, %cst_54 [2] : vector<2x4x256xf32> to vector<2x4xf32>
    %cst_55 = arith.constant 3.906250e-03 : f32
    %116 = vector.broadcast %cst_55 : f32 to vector<2x4xf32>
    %117 = arith.mulf %115, %116 : vector<2x4xf32>
    %cst_56 = arith.constant 0.000000e+00 : f32
    %118 = vector.broadcast %cst_56 : f32 to vector<2x16xf32>
    %c0_57 = arith.constant 0 : index
    %c0_58 = arith.constant 0 : index
    %119 = vector.load %arg5[%c0_57, %c0_58] : memref<1x16xf32, #tpu.memory_space<vmem>>, vector<1x16xf32>
    %120 = vector.broadcast %119 : vector<1x16xf32> to vector<2x16xf32>
    %121 = arith.addf %118, %120 : vector<2x16xf32>
    %122 = vector.extract_strided_slice %117 {offsets = [0, 0], sizes = [2, 1], strides = [1, 1]} : vector<2x4xf32> to vector<2x1xf32>
    %c0_59 = arith.constant 0 : index
    %c0_60 = arith.constant 0 : index
    %123 = vector.load %arg4[%c0_59, %c0_60] : memref<4x16xf32, #tpu.memory_space<vmem>>, vector<1x16xf32>
    %124 = vector.broadcast %122 : vector<2x1xf32> to vector<2x16xf32>
    %125 = vector.broadcast %123 : vector<1x16xf32> to vector<2x16xf32>
    %126 = arith.mulf %124, %125 : vector<2x16xf32>
    %127 = arith.addf %121, %126 : vector<2x16xf32>
    %128 = vector.extract_strided_slice %117 {offsets = [0, 1], sizes = [2, 1], strides = [1, 1]} : vector<2x4xf32> to vector<2x1xf32>
    %c1_61 = arith.constant 1 : index
    %c0_62 = arith.constant 0 : index
    %129 = vector.load %arg4[%c1_61, %c0_62] : memref<4x16xf32, #tpu.memory_space<vmem>>, vector<1x16xf32>
    %130 = vector.broadcast %128 : vector<2x1xf32> to vector<2x16xf32>
    %131 = vector.broadcast %129 : vector<1x16xf32> to vector<2x16xf32>
    %132 = arith.mulf %130, %131 : vector<2x16xf32>
    %133 = arith.addf %127, %132 : vector<2x16xf32>
    %134 = vector.extract_strided_slice %117 {offsets = [0, 2], sizes = [2, 1], strides = [1, 1]} : vector<2x4xf32> to vector<2x1xf32>
    %c2_63 = arith.constant 2 : index
    %c0_64 = arith.constant 0 : index
    %135 = vector.load %arg4[%c2_63, %c0_64] : memref<4x16xf32, #tpu.memory_space<vmem>>, vector<1x16xf32>
    %136 = vector.broadcast %134 : vector<2x1xf32> to vector<2x16xf32>
    %137 = vector.broadcast %135 : vector<1x16xf32> to vector<2x16xf32>
    %138 = arith.mulf %136, %137 : vector<2x16xf32>
    %139 = arith.addf %133, %138 : vector<2x16xf32>
    %140 = vector.extract_strided_slice %117 {offsets = [0, 3], sizes = [2, 1], strides = [1, 1]} : vector<2x4xf32> to vector<2x1xf32>
    %c3_65 = arith.constant 3 : index
    %c0_66 = arith.constant 0 : index
    %141 = vector.load %arg4[%c3_65, %c0_66] : memref<4x16xf32, #tpu.memory_space<vmem>>, vector<1x16xf32>
    %142 = vector.broadcast %140 : vector<2x1xf32> to vector<2x16xf32>
    %143 = vector.broadcast %141 : vector<1x16xf32> to vector<2x16xf32>
    %144 = arith.mulf %142, %143 : vector<2x16xf32>
    %145 = arith.addf %139, %144 : vector<2x16xf32>
    %146 = tpu.iota {dimensions = array<i32: 1>} : vector<2x16xi32>
    %147 = arith.negf %145 : vector<2x16xf32>
    %148 = math.exp %147 : vector<2x16xf32>
    %cst_67 = arith.constant 1.000000e+00 : f32
    %149 = vector.broadcast %cst_67 : f32 to vector<2x16xf32>
    %150 = arith.addf %149, %148 : vector<2x16xf32>
    %151 = arith.divf %149, %150 : vector<2x16xf32>
    %152 = math.absf %145 : vector<2x16xf32>
    %cst_68 = arith.constant 1.000000e+00 : f32
    %153 = vector.broadcast %cst_68 : f32 to vector<2x16xf32>
    %154 = arith.addf %153, %152 : vector<2x16xf32>
    %155 = arith.divf %145, %154 : vector<2x16xf32>
    %cst_69 = arith.constant 0.69813168 : f32
    %156 = vector.broadcast %cst_69 : f32 to vector<2x16xf32>
    %157 = arith.mulf %155, %156 : vector<2x16xf32>
    %c8_i32 = arith.constant 8 : i32
    %158 = vector.broadcast %c8_i32 : i32 to vector<2x16xi32>
    %159 = arith.cmpi slt, %146, %158 : vector<2x16xi32>
    %160 = arith.select %159, %151, %157 : vector<2x16xi1>, vector<2x16xf32>
    %c0_70 = arith.constant 0 : index
    %c0_71 = arith.constant 0 : index
    %161 = vector.load %arg7[%c0_70, %c0_71] : memref<2x16xf32, #tpu.memory_space<vmem>>, vector<2x16xf32>
    tpu.vector_store %arg7[%c0_70, %c0_71], %160 {strides = array<i32>} : memref<2x16xf32, #tpu.memory_space<vmem>>, vector<2x16xf32>,
    return
  }
}

</mosaic_0001>

<llo_original>
// kernel: routing_function.1
$region0: #{routing_function.1}
  #allocation0 [shape = 'u32[]', space=smem, size = 0x4, offset = 0x4, fixed_abs, tag = 'smem constant byte address 0x4 - core index']
  #allocation1 [shape = 'u32[144,128]{1,0:T(1,128)}', space=vmem, size = 0x12000, scoped, tag = 'internal scratch']
  %s0 = inlined_call_operand.vmem [shape: f32[2,4,256], index: 0, kind: input, shape index: {}]
  %s1 = inlined_call_operand.vmem [shape: f32[4,9], index: 1, kind: input, shape index: {}]
  %s2 = inlined_call_operand.vmem [shape: f32[4,1], index: 2, kind: input, shape index: {}]
  %s3 = inlined_call_operand.vmem [shape: f32[4,1], index: 3, kind: input, shape index: {}]
  %s4 = inlined_call_operand.vmem [shape: f32[4,16], index: 4, kind: input, shape index: {}]
  %s5 = inlined_call_operand.vmem [shape: f32[1,16], index: 5, kind: input, shape index: {}]
  %s6 = inlined_call_operand.vmem [shape: f32[9,1,1,256], index: 6, kind: input, shape index: {}]
  %s7 = inlined_call_operand.vmem [shape: f32[2,16], index: 7, kind: output, shape index: {}]
  %s8 = sld [smem:[#allocation0]]
  $region38: #{routing_function.1} parent=0
    _
  %s10 = ssub.s32 1, %s8
  %s11 = scalar_select 0, %s10, %s8
  // Predicated region
  $region2: #{routing_function.1} parent=0 // pred_check
    _
  $region3: #{routing_function.1} parent=0 // pred_check_branch
    %13 = sbr.rel (0) target = $region5
  $region4: #{routing_function.1} parent=0 // pred_region
    _
  $region5: #{routing_function.1} parent=0 // pred_fallthru
    _
  // Predicated region
  $region6: #{routing_function.1} parent=0 // pred_check
    _
  $region7: #{routing_function.1} parent=0 // pred_check_branch
    %15 = sbr.rel (0) target = $region9
  $region8: #{routing_function.1} parent=0 // pred_region
    _
  $region9: #{routing_function.1} parent=0 // pred_fallthru
    _
  // Predicated region
  $region10: #{routing_function.1} parent=0 // pred_check
    _
  $region11: #{routing_function.1} parent=0 // pred_check_branch
    %17 = sbr.rel (0) target = $region13
  $region12: #{routing_function.1} parent=0 // pred_region
    _
  $region13: #{routing_function.1} parent=0 // pred_fallthru
    _
  // Predicated region
  $region14: #{routing_function.1} parent=0 // pred_check
    _
  $region15: #{routing_function.1} parent=0 // pred_check_branch
    %19 = sbr.rel (0) target = $region17
  $region16: #{routing_function.1} parent=0 // pred_region
    _
  $region17: #{routing_function.1} parent=0 // pred_fallthru
    _
  // Predicated region
  $region18: #{routing_function.1} parent=0 // pred_check
    _
  $region19: #{routing_function.1} parent=0 // pred_check_branch
    %21 = sbr.rel (0) target = $region21
  $region20: #{routing_function.1} parent=0 // pred_region
    _
  $region21: #{routing_function.1} parent=0 // pred_fallthru
    _
  // Predicated region
  $region22: #{routing_function.1} parent=0 // pred_check
    _
  $region23: #{routing_function.1} parent=0 // pred_check_branch
    %23 = sbr.rel (0) target = $region25
  $region24: #{routing_function.1} parent=0 // pred_region
    _
  $region25: #{routing_function.1} parent=0 // pred_fallthru
    _
  // Predicated region
  $region26: #{routing_function.1} parent=0 // pred_check
    _
  $region27: #{routing_function.1} parent=0 // pred_check_branch
    %25 = sbr.rel (0) target = $region29
  $region28: #{routing_function.1} parent=0 // pred_region
    _
  $region29: #{routing_function.1} parent=0 // pred_fallthru
    _
  %v26 = vld [vmem:[%s0] sm:$0xff]
  %v27 = vld [vmem:[%s0 + $0x8] sm:$0xff]
  %v30 = vcombine.high %v26, %v26
  %v31 = vcombine.high %v27, %v27
  %34 = vrot.lane.b32.xlu0 %v26, 17
  %v35 = vpop.permute.xlu0 %34
  %36 = vrot.lane.b32.xlu0 %v27, 17
  %v37 = vpop.permute.xlu0 %36
  %38 = vrot.lane.b32.xlu0 %v30, 17
  %v39 = vpop.permute.xlu0 %38
  %40 = vrot.lane.b32.xlu0 %v31, 17
  %v41 = vpop.permute.xlu0 %40
  %v42 = vlaneseq
  %v43 = vand.u32 %v42, 127
  %vm44 = vcmp.lt.s32.totalorder %v43, 17
  %v45 = vsel %vm44, %v35, %v39
  %v46 = vsel %vm44, %v37, %v41
  %v47 = vsel %vm44, %v39, %v35
  %v48 = vsel %vm44, %v41, %v37
  %v49 = vld [vmem:[%s6] sm:$0x3]
  %v51 = vlaneseq
  %v52 = vshrl.u32 %v51, 7
  %v53 = vsub.s32 0, %v52
  %v54 = vrot.slane %v49, %v53
  %v55 = vlaneseq
  %v56 = vshrl.u32 %v55, 7
  %v57 = vsub.s32 1, %v56
  %v58 = vrot.slane %v49, %v57
  %v61 = vmul.f32 %v47, %v54
  %v62 = vmul.f32 %v45, %v58
  %v63 = vmul.f32 %v48, %v54
  %v64 = vmul.f32 %v46, %v58
  %v65 = vld [vmem:[%s1] sm:$0xf]
  %67 = vset.pattern.permute.xlu0 0
  %68 = vperm.xlu0 %67, %v65
  %v69 = vpop.permute.xlu0 %68
  %v71 = vmul.f32 %v61, %v69
  %v72 = vmul.f32 %v62, %v69
  %v73 = vmul.f32 %v63, %v69
  %v74 = vmul.f32 %v64, %v69
  %v75 = vadd.f32 %v71, 0.0
  %v76 = vadd.f32 %v72, 0.0
  %v77 = vadd.f32 %v73, 0.0
  %v78 = vadd.f32 %v74, 0.0
  %79 = vrot.lane.b32.xlu0 %v26, 16
  %v80 = vpop.permute.xlu0 %79
  %81 = vrot.lane.b32.xlu0 %v27, 16
  %v82 = vpop.permute.xlu0 %81
  %83 = vrot.lane.b32.xlu0 %v30, 16
  %v84 = vpop.permute.xlu0 %83
  %85 = vrot.lane.b32.xlu0 %v31, 16
  %v86 = vpop.permute.xlu0 %85
  %vm87 = vcmp.lt.s32.totalorder %v43, 16
  %v88 = vsel %vm87, %v80, %v84
  %v89 = vsel %vm87, %v82, %v86
  %v90 = vsel %vm87, %v84, %v80
  %v91 = vsel %vm87, %v86, %v82
  %s92 = scalar_lea.vmem %s6, 2
  %v93 = vld [vmem:[%s92] sm:$0x3]
  %v95 = vlaneseq
  %v96 = vshrl.u32 %v95, 7
  %v97 = vsub.s32 0, %v96
  %v98 = vrot.slane %v93, %v97
  %v99 = vlaneseq
  %v100 = vshrl.u32 %v99, 7
  %v101 = vsub.s32 1, %v100
  %v102 = vrot.slane %v93, %v101
  %v105 = vmul.f32 %v90, %v98
  %v106 = vmul.f32 %v88, %v102
  %v107 = vmul.f32 %v91, %v98
  %v108 = vmul.f32 %v89, %v102
  %v109 = vld [vmem:[%s1] sm:$0xf]
  %111 = vset.pattern.permute.xlu0 1
  %112 = vperm.xlu0 %111, %v109
  %v113 = vpop.permute.xlu0 %112
  %v115 = vmul.f32 %v105, %v113
  %v116 = vmul.f32 %v106, %v113
  %v117 = vmul.f32 %v107, %v113
  %v118 = vmul.f32 %v108, %v113
  %v119 = vadd.f32 %v75, %v115
  %v120 = vadd.f32 %v76, %v116
  %v121 = vadd.f32 %v77, %v117
  %v122 = vadd.f32 %v78, %v118
  %123 = vrot.lane.b32.xlu0 %v26, 15
  %v124 = vpop.permute.xlu0 %123
  %125 = vrot.lane.b32.xlu0 %v27, 15
  %v126 = vpop.permute.xlu0 %125
  %127 = vrot.lane.b32.xlu0 %v30, 15
  %v128 = vpop.permute.xlu0 %127
  %129 = vrot.lane.b32.xlu0 %v31, 15
  %v130 = vpop.permute.xlu0 %129
  %vm131 = vcmp.lt.s32.totalorder %v43, 15
  %v132 = vsel %vm131, %v124, %v128
  %v133 = vsel %vm131, %v126, %v130
  %v134 = vsel %vm131, %v128, %v124
  %v135 = vsel %vm131, %v130, %v126
  %s136 = scalar_lea.vmem %s6, 4
  %v137 = vld [vmem:[%s136] sm:$0x3]
  %v139 = vlaneseq
  %v140 = vshrl.u32 %v139, 7
  %v141 = vsub.s32 0, %v140
  %v142 = vrot.slane %v137, %v141
  %v143 = vlaneseq
  %v144 = vshrl.u32 %v143, 7
  %v145 = vsub.s32 1, %v144
  %v146 = vrot.slane %v137, %v145
  %v149 = vmul.f32 %v134, %v142
  %v150 = vmul.f32 %v132, %v146
  %v151 = vmul.f32 %v135, %v142
  %v152 = vmul.f32 %v133, %v146
  %v153 = vld [vmem:[%s1] sm:$0xf]
  %155 = vset.pattern.permute.xlu0 2
  %156 = vperm.xlu0 %155, %v153
  %v157 = vpop.permute.xlu0 %156
  %v159 = vmul.f32 %v149, %v157
  %v160 = vmul.f32 %v150, %v157
  %v161 = vmul.f32 %v151, %v157
  %v162 = vmul.f32 %v152, %v157
  %v163 = vadd.f32 %v119, %v159
  %v164 = vadd.f32 %v120, %v160
  %v165 = vadd.f32 %v121, %v161
  %v166 = vadd.f32 %v122, %v162
  %167 = vrot.lane.b32.xlu0 %v26, 1
  %v168 = vpop.permute.xlu0 %167
  %169 = vrot.lane.b32.xlu0 %v27, 1
  %v170 = vpop.permute.xlu0 %169
  %171 = vrot.lane.b32.xlu0 %v30, 1
  %v172 = vpop.permute.xlu0 %171
  %173 = vrot.lane.b32.xlu0 %v31, 1
  %v174 = vpop.permute.xlu0 %173
  %vm175 = vcmp.lt.s32.totalorder %v43, 1
  %v176 = vsel %vm175, %v168, %v172
  %v177 = vsel %vm175, %v170, %v174
  %v178 = vsel %vm175, %v172, %v168
  %v179 = vsel %vm175, %v174, %v170
  %s180 = scalar_lea.vmem %s6, 6
  %v181 = vld [vmem:[%s180] sm:$0x3]
  %v183 = vlaneseq
  %v184 = vshrl.u32 %v183, 7
  %v185 = vsub.s32 0, %v184
  %v186 = vrot.slane %v181, %v185
  %v187 = vlaneseq
  %v188 = vshrl.u32 %v187, 7
  %v189 = vsub.s32 1, %v188
  %v190 = vrot.slane %v181, %v189
  %v193 = vmul.f32 %v178, %v186
  %v194 = vmul.f32 %v176, %v190
  %v195 = vmul.f32 %v179, %v186
  %v196 = vmul.f32 %v177, %v190
  %v197 = vld [vmem:[%s1] sm:$0xf]
  %199 = vset.pattern.permute.xlu0 3
  %200 = vperm.xlu0 %199, %v197
  %v201 = vpop.permute.xlu0 %200
  %v203 = vmul.f32 %v193, %v201
  %v204 = vmul.f32 %v194, %v201
  %v205 = vmul.f32 %v195, %v201
  %v206 = vmul.f32 %v196, %v201
  %v207 = vadd.f32 %v163, %v203
  %v208 = vadd.f32 %v164, %v204
  %v209 = vadd.f32 %v165, %v205
  %v210 = vadd.f32 %v166, %v206
  %211 = vset.pattern.permute.xlu0 4
  %212 = vperm.xlu0 %211, %v197
  %v213 = vpop.permute.xlu0 %212
  %v215 = vunpack.c.l.s4 839922192
  %v216 = vunpack.c.0.s8 %v215
  %v217 = vlaneseq
  %v218 = vshrl.u32 %v217, 7
  %v219 = vsub.s32 %v216, %v218
  %v220 = vrot.slane %v213, %v219
  %v222 = vmul.f32 %v26, %v220
  %v223 = vmul.f32 %v27, %v220
  %v226 = vcombine.high %v222, %v222
  %v227 = vcombine.high %v223, %v223
  %v230 = vadd.f32 %v207, %v222
  %v231 = vadd.f32 %v208, %v226
  %v232 = vadd.f32 %v209, %v223
  %v233 = vadd.f32 %v210, %v227
  %234 = vrot.lane.b32.xlu0 %v26, 127
  %v235 = vpop.permute.xlu0 %234
  %236 = vrot.lane.b32.xlu0 %v27, 127
  %v237 = vpop.permute.xlu0 %236
  %238 = vrot.lane.b32.xlu0 %v30, 127
  %v239 = vpop.permute.xlu0 %238
  %240 = vrot.lane.b32.xlu0 %v31, 127
  %v241 = vpop.permute.xlu0 %240
  %vm242 = vcmp.lt.s32.totalorder %v43, 127
  %v243 = vsel %vm242, %v235, %v239
  %v244 = vsel %vm242, %v237, %v241
  %v245 = vsel %vm242, %v239, %v235
  %v246 = vsel %vm242, %v241, %v237
  %s247 = scalar_lea.vmem %s6, 10
  %v248 = vld [vmem:[%s247] sm:$0x3]
  %v250 = vlaneseq
  %v251 = vshrl.u32 %v250, 7
  %v252 = vsub.s32 0, %v251
  %v253 = vrot.slane %v248, %v252
  %v254 = vlaneseq
  %v255 = vshrl.u32 %v254, 7
  %v256 = vsub.s32 1, %v255
  %v257 = vrot.slane %v248, %v256
  %v260 = vmul.f32 %v243, %v253
  %v261 = vmul.f32 %v245, %v257
  %v262 = vmul.f32 %v244, %v253
  %v263 = vmul.f32 %v246, %v257
  %v264 = vld [vmem:[%s1] sm:$0xf]
  %266 = vset.pattern.permute.xlu0 5
  %267 = vperm.xlu0 %266, %v264
  %v268 = vpop.permute.xlu0 %267
  %v270 = vmul.f32 %v260, %v268
  %v271 = vmul.f32 %v261, %v268
  %v272 = vmul.f32 %v262, %v268
  %v273 = vmul.f32 %v263, %v268
  %v274 = vadd.f32 %v230, %v270
  %v275 = vadd.f32 %v231, %v271
  %v276 = vadd.f32 %v232, %v272
  %v277 = vadd.f32 %v233, %v273
  %278 = vrot.lane.b32.xlu0 %v26, 113
  %v279 = vpop.permute.xlu0 %278
  %280 = vrot.lane.b32.xlu0 %v27, 113
  %v281 = vpop.permute.xlu0 %280
  %282 = vrot.lane.b32.xlu0 %v30, 113
  %v283 = vpop.permute.xlu0 %282
  %284 = vrot.lane.b32.xlu0 %v31, 113
  %v285 = vpop.permute.xlu0 %284
  %vm286 = vcmp.lt.s32.totalorder %v43, 113
  %v287 = vsel %vm286, %v279, %v283
  %v288 = vsel %vm286, %v281, %v285
  %v289 = vsel %vm286, %v283, %v279
  %v290 = vsel %vm286, %v285, %v281
  %s291 = scalar_lea.vmem %s6, 12
  %v292 = vld [vmem:[%s291] sm:$0x3]
  %v294 = vlaneseq
  %v295 = vshrl.u32 %v294, 7
  %v296 = vsub.s32 0, %v295
  %v297 = vrot.slane %v292, %v296
  %v298 = vlaneseq
  %v299 = vshrl.u32 %v298, 7
  %v300 = vsub.s32 1, %v299
  %v301 = vrot.slane %v292, %v300
  %v304 = vmul.f32 %v287, %v297
  %v305 = vmul.f32 %v289, %v301
  %v306 = vmul.f32 %v288, %v297
  %v307 = vmul.f32 %v290, %v301
  %v308 = vld [vmem:[%s1] sm:$0xf]
  %310 = vset.pattern.permute.xlu0 6
  %311 = vperm.xlu0 %310, %v308
  %v312 = vpop.permute.xlu0 %311
  %v314 = vmul.f32 %v304, %v312
  %v315 = vmul.f32 %v305, %v312
  %v316 = vmul.f32 %v306, %v312
  %v317 = vmul.f32 %v307, %v312
  %v318 = vadd.f32 %v274, %v314
  %v319 = vadd.f32 %v275, %v315
  %v320 = vadd.f32 %v276, %v316
  %v321 = vadd.f32 %v277, %v317
  %322 = vrot.lane.b32.xlu0 %v26, 112
  %v323 = vpop.permute.xlu0 %322
  %324 = vrot.lane.b32.xlu0 %v27, 112
  %v325 = vpop.permute.xlu0 %324
  %326 = vrot.lane.b32.xlu0 %v30, 112
  %v327 = vpop.permute.xlu0 %326
  %328 = vrot.lane.b32.xlu0 %v31, 112
  %v329 = vpop.permute.xlu0 %328
  %vm330 = vcmp.lt.s32.totalorder %v43, 112
  %v331 = vsel %vm330, %v323, %v327
  %v332 = vsel %vm330, %v325, %v329
  %v333 = vsel %vm330, %v327, %v323
  %v334 = vsel %vm330, %v329, %v325
  %s335 = scalar_lea.vmem %s6, 14
  %v336 = vld [vmem:[%s335] sm:$0x3]
  %v338 = vlaneseq
  %v339 = vshrl.u32 %v338, 7
  %v340 = vsub.s32 0, %v339
  %v341 = vrot.slane %v336, %v340
  %v342 = vlaneseq
  %v343 = vshrl.u32 %v342, 7
  %v344 = vsub.s32 1, %v343
  %v345 = vrot.slane %v336, %v344
  %v348 = vmul.f32 %v331, %v341
  %v349 = vmul.f32 %v333, %v345
  %v350 = vmul.f32 %v332, %v341
  %v351 = vmul.f32 %v334, %v345
  %v352 = vld [vmem:[%s1] sm:$0xf]
  %354 = vset.pattern.permute.xlu0 7
  %355 = vperm.xlu0 %354, %v352
  %v356 = vpop.permute.xlu0 %355
  %v358 = vmul.f32 %v348, %v356
  %v359 = vmul.f32 %v349, %v356
  %v360 = vmul.f32 %v350, %v356
  %v361 = vmul.f32 %v351, %v356
  %v362 = vadd.f32 %v318, %v358
  %v363 = vadd.f32 %v319, %v359
  %v364 = vadd.f32 %v320, %v360
  %v365 = vadd.f32 %v321, %v361
  %366 = vrot.lane.b32.xlu0 %v26, 111
  %v367 = vpop.permute.xlu0 %366
  %368 = vrot.lane.b32.xlu0 %v27, 111
  %v369 = vpop.permute.xlu0 %368
  %370 = vrot.lane.b32.xlu0 %v30, 111
  %v371 = vpop.permute.xlu0 %370
  %372 = vrot.lane.b32.xlu0 %v31, 111
  %v373 = vpop.permute.xlu0 %372
  %vm374 = vcmp.lt.s32.totalorder %v43, 111
  %v375 = vsel %vm374, %v367, %v371
  %v376 = vsel %vm374, %v369, %v373
  %v377 = vsel %vm374, %v371, %v367
  %v378 = vsel %vm374, %v373, %v369
  %s379 = scalar_lea.vmem %s6, 16
  %v380 = vld [vmem:[%s379] sm:$0x3]
  %v382 = vlaneseq
  %v383 = vshrl.u32 %v382, 7
  %v384 = vsub.s32 0, %v383
  %v385 = vrot.slane %v380, %v384
  %v386 = vlaneseq
  %v387 = vshrl.u32 %v386, 7
  %v388 = vsub.s32 1, %v387
  %v389 = vrot.slane %v380, %v388
  %v392 = vmul.f32 %v375, %v385
  %v393 = vmul.f32 %v377, %v389
  %v394 = vmul.f32 %v376, %v385
  %v395 = vmul.f32 %v378, %v389
  %v396 = vld [vmem:[%s1] sm:$0xf]
  %398 = vset.pattern.permute.xlu0 8
  %399 = vperm.xlu0 %398, %v396
  %v400 = vpop.permute.xlu0 %399
  %v402 = vmul.f32 %v392, %v400
  %v403 = vmul.f32 %v393, %v400
  %v404 = vmul.f32 %v394, %v400
  %v405 = vmul.f32 %v395, %v400
  %v406 = vadd.f32 %v362, %v402
  %v407 = vadd.f32 %v363, %v403
  %v408 = vadd.f32 %v364, %v404
  %v409 = vadd.f32 %v365, %v405
  %vm410 = vcmask 1043456
  %v411 = vsel %vm410, %v406, 0.0
  %v412 = vrot.slane %v411, 4
  %v413 = vadd.f32 %v411, %v412
  %v414 = vrot.slane %v413, 2
  %v415 = vadd.f32 %v413, %v414
  %v416 = vrot.slane %v415, 1
  %v417 = vadd.f32 %v415, %v416
  %v418 = vsel %vm410, %v407, 0.0
  %v419 = vrot.slane %v418, 4
  %v420 = vadd.f32 %v418, %v419
  %v421 = vrot.slane %v420, 2
  %v422 = vadd.f32 %v420, %v421
  %v423 = vrot.slane %v422, 1
  %v424 = vadd.f32 %v422, %v423
  %v425 = vsel %vm410, %v408, 0.0
  %v426 = vrot.slane %v425, 4
  %v427 = vadd.f32 %v425, %v426
  %v428 = vrot.slane %v427, 2
  %v429 = vadd.f32 %v427, %v428
  %v430 = vrot.slane %v429, 1
  %v431 = vadd.f32 %v429, %v430
  %v432 = vsel %vm410, %v409, 0.0
  %v433 = vrot.slane %v432, 4
  %v434 = vadd.f32 %v432, %v433
  %v435 = vrot.slane %v434, 2
  %v436 = vadd.f32 %v434, %v435
  %v437 = vrot.slane %v436, 1
  %v438 = vadd.f32 %v436, %v437
  %v439 = vrcp.pop 4.0
  %v440 = vmul.f32 %v417, %v439
  %v441 = vmul.f32 %v424, %v439
  %v442 = vmul.f32 %v431, %v439
  %v443 = vmul.f32 %v438, %v439
  %v444 = vsub.f32 %v406, %v440
  %v445 = vsub.f32 %v407, %v441
  %v446 = vsub.f32 %v408, %v442
  %v447 = vsub.f32 %v409, %v443
  %v448 = vmul.f32 %v444, %v444
  %v449 = vmul.f32 %v445, %v445
  %v450 = vmul.f32 %v446, %v446
  %v451 = vmul.f32 %v447, %v447
  %v452 = vsel %vm410, %v448, 0.0
  %v453 = vrot.slane %v452, 4
  %v454 = vadd.f32 %v452, %v453
  %v455 = vrot.slane %v454, 2
  %v456 = vadd.f32 %v454, %v455
  %v457 = vrot.slane %v456, 1
  %v458 = vadd.f32 %v456, %v457
  %v459 = vsel %vm410, %v449, 0.0
  %v460 = vrot.slane %v459, 4
  %v461 = vadd.f32 %v459, %v460
  %v462 = vrot.slane %v461, 2
  %v463 = vadd.f32 %v461, %v462
  %v464 = vrot.slane %v463, 1
  %v465 = vadd.f32 %v463, %v464
  %v466 = vsel %vm410, %v450, 0.0
  %v467 = vrot.slane %v466, 4
  %v468 = vadd.f32 %v466, %v467
  %v469 = vrot.slane %v468, 2
  %v470 = vadd.f32 %v468, %v469
  %v471 = vrot.slane %v470, 1
  %v472 = vadd.f32 %v470, %v471
  %v473 = vsel %vm410, %v451, 0.0
  %v474 = vrot.slane %v473, 4
  %v475 = vadd.f32 %v473, %v474
  %v476 = vrot.slane %v475, 2
  %v477 = vadd.f32 %v475, %v476
  %v478 = vrot.slane %v477, 1
  %v479 = vadd.f32 %v477, %v478
  %v480 = vmul.f32 %v458, %v439
  %v481 = vmul.f32 %v465, %v439
  %v482 = vmul.f32 %v472, %v439
  %v483 = vmul.f32 %v479, %v439
  %v484 = vadd.f32 %v480, 1e-05
  %v485 = vadd.f32 %v481, 1e-05
  %v486 = vadd.f32 %v482, 1e-05
  %v487 = vadd.f32 %v483, 1e-05
  %v488 = vrsqrt.pop %v484
  %v489 = vrsqrt.pop %v485
  %v490 = vrsqrt.pop %v486
  %v491 = vrsqrt.pop %v487
  %v492 = vmul.f32 %v444, %v488
  %v493 = vmul.f32 %v445, %v489
  %v494 = vmul.f32 %v446, %v490
  %v495 = vmul.f32 %v447, %v491
  %v496 = vld [vmem:[%s2] sm:$0xf]
  %498 = vset.pattern.permute.xlu0 0
  %499 = vperm.xlu0 %498, %v496
  %v500 = vpop.permute.xlu0 %499
  %v502 = vmul.f32 %v492, %v500
  %v503 = vmul.f32 %v493, %v500
  %v504 = vmul.f32 %v494, %v500
  %v505 = vmul.f32 %v495, %v500
  %v506 = vld [vmem:[%s3] sm:$0xf]
  %508 = vset.pattern.permute.xlu0 0
  %509 = vperm.xlu0 %508, %v506
  %v510 = vpop.permute.xlu0 %509
  %v512 = vadd.f32 %v502, %v510
  %v513 = vadd.f32 %v503, %v510
  %v514 = vadd.f32 %v504, %v510
  %v515 = vadd.f32 %v505, %v510
  %v516 = vmax.f32 %v512, 0.0
  %v517 = vmax.f32 %v513, 0.0
  %v518 = vmax.f32 %v514, 0.0
  %v519 = vmax.f32 %v515, 0.0
  %v520 = vsel %vm410, %v516, 0.0
  %v521 = vsel %vm410, %v517, 0.0
  %v522 = vadd.f32 %v520, %v521
  %523 = vadd.xlane.f32.xlu0 %v522
  %v524 = vpop.xlane.xlu0 %523
  %v525 = vsel %vm410, %v518, 0.0
  %v526 = vsel %vm410, %v519, 0.0
  %v527 = vadd.f32 %v525, %v526
  %528 = vadd.xlane.f32.xlu0 %v527
  %v529 = vpop.xlane.xlu0 %528
  %v530 = vmul.f32 %v524, 0.00390625
  %v531 = vmul.f32 %v529, 0.00390625
  %v532 = vld [vmem:[%s5] sm:$0x1]
  %v534 = vlaneseq
  %v535 = vshrl.u32 %v534, 7
  %v536 = vsub.s32 0, %v535
  %v537 = vrot.slane %v532, %v536
  %v539 = vadd.f32 %v537, 0.0
  %v540 = vld [vmem:[%s4] sm:$0x1]
  %v541 = vlaneseq
  %v542 = vshrl.u32 %v541, 7
  %v543 = vsub.s32 0, %v542
  %v544 = vrot.slane %v530, %v543
  %v545 = vlaneseq
  %v546 = vshrl.u32 %v545, 7
  %v547 = vsub.s32 0, %v546
  %v548 = vrot.slane %v531, %v547
  %v549 = vlaneseq
  %v550 = vshrl.u32 %v549, 7
  %v551 = vsub.s32 0, %v550
  %v552 = vrot.slane %v540, %v551
  %555 = vbcast.lane.b32.xlu0 %v552, 256
  %v556 = vpop.permute.xlu0 %555
  %s558 = sor.u32 256, 8
  %559 = vbcast.lane.b32.xlu0 %v552, %s558
  %v560 = vpop.permute.xlu0 %559
  %v563 = vmul.f32 %v544, %v556
  %v564 = vmul.f32 %v544, %v560
  %v565 = vmul.f32 %v548, %v556
  %v566 = vmul.f32 %v548, %v560
  %571 = vset.pattern.permute.xlu0 0
  %572 = vperm.xlu0 %571, %v563
  %v573 = vpop.permute.xlu0 %572
  %574 = vset.pattern.permute.xlu0 0
  %575 = vperm.xlu0 %574, %v564
  %v576 = vpop.permute.xlu0 %575
  %577 = vset.pattern.permute.xlu0 0
  %578 = vperm.xlu0 %577, %v565
  %v579 = vpop.permute.xlu0 %578
  %580 = vset.pattern.permute.xlu0 0
  %581 = vperm.xlu0 %580, %v566
  %v582 = vpop.permute.xlu0 %581
  %v583 = vlaneseq
  %v584 = vshrl.u32 %v583, 7
  %v585 = vsub.s32 %v43, %v584
  %v586 = vrot.slane %v573, %v585
  %v587 = vadd.s32 %v43, 4294967288
  %v588 = vlaneseq
  %v589 = vshrl.u32 %v588, 7
  %v590 = vsub.s32 %v587, %v589
  %v591 = vrot.slane %v576, %v590
  %vm592 = vcmask 130112
  %v593 = vsel %vm592, %v591, %v586
  %v594 = vlaneseq
  %v595 = vshrl.u32 %v594, 7
  %v596 = vsub.s32 %v43, %v595
  %v597 = vrot.slane %v579, %v596
  %v598 = vlaneseq
  %v599 = vshrl.u32 %v598, 7
  %v600 = vsub.s32 %v587, %v599
  %v601 = vrot.slane %v582, %v600
  %v602 = vsel %vm592, %v601, %v597
  %vm603 = vcmask 1041409
  %v604 = vsel %vm603, %v602, %v593
  %v606 = vadd.f32 %v539, %v604
  %v607 = vld [vmem:[%s4 + $0x1] sm:$0x1]
  %v608 = vlaneseq
  %v609 = vshrl.u32 %v608, 7
  %v610 = vsub.s32 1, %v609
  %v611 = vrot.slane %v530, %v610
  %v612 = vlaneseq
  %v613 = vshrl.u32 %v612, 7
  %v614 = vsub.s32 1, %v613
  %v615 = vrot.slane %v531, %v614
  %v616 = vlaneseq
  %v617 = vshrl.u32 %v616, 7
  %v618 = vsub.s32 0, %v617
  %v619 = vrot.slane %v607, %v618
  %622 = vbcast.lane.b32.xlu0 %v619, 256
  %v623 = vpop.permute.xlu0 %622
  %s625 = sor.u32 256, 8
  %626 = vbcast.lane.b32.xlu0 %v619, %s625
  %v627 = vpop.permute.xlu0 %626
  %v630 = vmul.f32 %v611, %v623
  %v631 = vmul.f32 %v611, %v627
  %v632 = vmul.f32 %v615, %v623
  %v633 = vmul.f32 %v615, %v627
  %638 = vset.pattern.permute.xlu0 0
  %639 = vperm.xlu0 %638, %v630
  %v640 = vpop.permute.xlu0 %639
  %641 = vset.pattern.permute.xlu0 0
  %642 = vperm.xlu0 %641, %v631
  %v643 = vpop.permute.xlu0 %642
  %644 = vset.pattern.permute.xlu0 0
  %645 = vperm.xlu0 %644, %v632
  %v646 = vpop.permute.xlu0 %645
  %647 = vset.pattern.permute.xlu0 0
  %648 = vperm.xlu0 %647, %v633
  %v649 = vpop.permute.xlu0 %648
  %v650 = vlaneseq
  %v651 = vshrl.u32 %v650, 7
  %v652 = vsub.s32 %v43, %v651
  %v653 = vrot.slane %v640, %v652
  %v654 = vlaneseq
  %v655 = vshrl.u32 %v654, 7
  %v656 = vsub.s32 %v587, %v655
  %v657 = vrot.slane %v643, %v656
  %v658 = vsel %vm592, %v657, %v653
  %v659 = vlaneseq
  %v660 = vshrl.u32 %v659, 7
  %v661 = vsub.s32 %v43, %v660
  %v662 = vrot.slane %v646, %v661
  %v663 = vlaneseq
  %v664 = vshrl.u32 %v663, 7
  %v665 = vsub.s32 %v587, %v664
  %v666 = vrot.slane %v649, %v665
  %v667 = vsel %vm592, %v666, %v662
  %v668 = vsel %vm603, %v667, %v658
  %v670 = vadd.f32 %v606, %v668
  %v671 = vld [vmem:[%s4 + $0x2] sm:$0x1]
  %v672 = vlaneseq
  %v673 = vshrl.u32 %v672, 7
  %v674 = vsub.s32 2, %v673
  %v675 = vrot.slane %v530, %v674
  %v676 = vlaneseq
  %v677 = vshrl.u32 %v676, 7
  %v678 = vsub.s32 2, %v677
  %v679 = vrot.slane %v531, %v678
  %v680 = vlaneseq
  %v681 = vshrl.u32 %v680, 7
  %v682 = vsub.s32 0, %v681
  %v683 = vrot.slane %v671, %v682
  %686 = vbcast.lane.b32.xlu0 %v683, 256
  %v687 = vpop.permute.xlu0 %686
  %s689 = sor.u32 256, 8
  %690 = vbcast.lane.b32.xlu0 %v683, %s689
  %v691 = vpop.permute.xlu0 %690
  %v694 = vmul.f32 %v675, %v687
  %v695 = vmul.f32 %v675, %v691
  %v696 = vmul.f32 %v679, %v687
  %v697 = vmul.f32 %v679, %v691
  %702 = vset.pattern.permute.xlu0 0
  %703 = vperm.xlu0 %702, %v694
  %v704 = vpop.permute.xlu0 %703
  %705 = vset.pattern.permute.xlu0 0
  %706 = vperm.xlu0 %705, %v695
  %v707 = vpop.permute.xlu0 %706
  %708 = vset.pattern.permute.xlu0 0
  %709 = vperm.xlu0 %708, %v696
  %v710 = vpop.permute.xlu0 %709
  %711 = vset.pattern.permute.xlu0 0
  %712 = vperm.xlu0 %711, %v697
  %v713 = vpop.permute.xlu0 %712
  %v714 = vlaneseq
  %v715 = vshrl.u32 %v714, 7
  %v716 = vsub.s32 %v43, %v715
  %v717 = vrot.slane %v704, %v716
  %v718 = vlaneseq
  %v719 = vshrl.u32 %v718, 7
  %v720 = vsub.s32 %v587, %v719
  %v721 = vrot.slane %v707, %v720
  %v722 = vsel %vm592, %v721, %v717
  %v723 = vlaneseq
  %v724 = vshrl.u32 %v723, 7
  %v725 = vsub.s32 %v43, %v724
  %v726 = vrot.slane %v710, %v725
  %v727 = vlaneseq
  %v728 = vshrl.u32 %v727, 7
  %v729 = vsub.s32 %v587, %v728
  %v730 = vrot.slane %v713, %v729
  %v731 = vsel %vm592, %v730, %v726
  %v732 = vsel %vm603, %v731, %v722
  %v734 = vadd.f32 %v670, %v732
  %v735 = vld [vmem:[%s4 + $0x3] sm:$0x1]
  %v736 = vlaneseq
  %v737 = vshrl.u32 %v736, 7
  %v738 = vsub.s32 3, %v737
  %v739 = vrot.slane %v530, %v738
  %v740 = vlaneseq
  %v741 = vshrl.u32 %v740, 7
  %v742 = vsub.s32 3, %v741
  %v743 = vrot.slane %v531, %v742
  %v744 = vlaneseq
  %v745 = vshrl.u32 %v744, 7
  %v746 = vsub.s32 0, %v745
  %v747 = vrot.slane %v735, %v746
  %750 = vbcast.lane.b32.xlu0 %v747, 256
  %v751 = vpop.permute.xlu0 %750
  %s753 = sor.u32 256, 8
  %754 = vbcast.lane.b32.xlu0 %v747, %s753
  %v755 = vpop.permute.xlu0 %754
  %v758 = vmul.f32 %v739, %v751
  %v759 = vmul.f32 %v739, %v755
  %v760 = vmul.f32 %v743, %v751
  %v761 = vmul.f32 %v743, %v755
  %766 = vset.pattern.permute.xlu0 0
  %767 = vperm.xlu0 %766, %v758
  %v768 = vpop.permute.xlu0 %767
  %769 = vset.pattern.permute.xlu0 0
  %770 = vperm.xlu0 %769, %v759
  %v771 = vpop.permute.xlu0 %770
  %772 = vset.pattern.permute.xlu0 0
  %773 = vperm.xlu0 %772, %v760
  %v774 = vpop.permute.xlu0 %773
  %775 = vset.pattern.permute.xlu0 0
  %776 = vperm.xlu0 %775, %v761
  %v777 = vpop.permute.xlu0 %776
  %v778 = vlaneseq
  %v779 = vshrl.u32 %v778, 7
  %v780 = vsub.s32 %v43, %v779
  %v781 = vrot.slane %v768, %v780
  %v782 = vlaneseq
  %v783 = vshrl.u32 %v782, 7
  %v784 = vsub.s32 %v587, %v783
  %v785 = vrot.slane %v771, %v784
  %v786 = vsel %vm592, %v785, %v781
  %v787 = vlaneseq
  %v788 = vshrl.u32 %v787, 7
  %v789 = vsub.s32 %v43, %v788
  %v790 = vrot.slane %v774, %v789
  %v791 = vlaneseq
  %v792 = vshrl.u32 %v791, 7
  %v793 = vsub.s32 %v587, %v792
  %v794 = vrot.slane %v777, %v793
  %v795 = vsel %vm592, %v794, %v790
  %v796 = vsel %vm603, %v795, %v786
  %v798 = vadd.f32 %v734, %v796
  %v799 = vxor.u32 %v798, 2147483648
  %v800 = vmul.f32 %v799, 1.442695
  %v801 = vpow.pop %v800
  %v802 = vadd.f32 %v801, 1.0
  %v803 = vrcp.pop %v802
  %v804 = vmul.f32 1.0, %v803
  %v805 = vand.u32 2147483647, %v798
  %v806 = vadd.f32 %v805, 1.0
  %v807 = vrcp.pop %v806
  %v808 = vmul.f32 %v798, %v807
  %v809 = vmul.f32 %v808, 0.6981317
  %vm810 = vcmp.lt.s32.totalorder %v43, 8
  %v811 = vsel %vm810, %v804, %v809
  %vm812 = vcmask 123904
  %813 = vst.msk [vmem:[%s7] sm:$0x3] %vm812, %v811
  // Predicated region
  $region30: #{routing_function.1} parent=0 // pred_check
    _
  $region31: #{routing_function.1} parent=0 // pred_check_branch
    %815 = sbr.rel (0) target = $region33
  $region32: #{routing_function.1} parent=0 // pred_region
    _
  $region33: #{routing_function.1} parent=0 // pred_fallthru
    _
  // Predicated region
  $region34: #{routing_function.1} parent=0 // pred_check
    _
  $region35: #{routing_function.1} parent=0 // pred_check_branch
    %817 = sbr.rel (0) target = $region37
  $region36: #{routing_function.1} parent=0 // pred_region
    _
  $region37: #{routing_function.1} parent=0 // pred_fallthru
    _

</llo_original>
